<compile_context>
chip_gen: v6e
topology: v6e:2x2x1
jax: 0.10.0
libtpu: 0.0.40
codegen_flags: <defaults>
</compile_context>

<pallas_src>
import jax
import jax.numpy as jnp
from jax.experimental import pallas as pl
from jax.experimental.pallas import tpu as pltpu


def _round_up(x: int, m: int) -> int:
    return ((x + m - 1) // m) * m


def _make_transe_tile_kernel(margin: float, batch_size: int, tile_rows: int, d: int):
    # All constants below are Python scalars -> jaxpr literals (no captured arrays).
    eps = 1e-8            # epsilon added before normalization (as in the module)
    norm_floor_sq = 1e-24  # (1e-12)^2 : F.normalize clamps the divisor at 1e-12
    margin_f = float(margin)

    def kernel(ph_ref, pr_ref, pt_ref, nh_ref, nr_ref, nt_ref, sum_ref):
        # All-ones matrix created once per body invocation (in-kernel splat, not a
        # captured constant).  x*x @ ones gives the row-sum-of-squares broadcast
        # across every lane, so the whole pipeline stays lane-dense and the six
        # cross-lane reductions ride the otherwise-idle MXU instead of the XLU.
        ones = jnp.ones((d, d), jnp.float32)

        def row_ssq(x):
            return jnp.dot(x * x, ones, preferred_element_type=jnp.float32)  # (TB, D)

        def l2_normalize(x):
            x = x + eps
            ssq = row_ssq(x)
            # rsqrt rides the EUP slot; clamp the *squared* norm to preserve
            # F.normalize's max(norm, 1e-12) semantics.
            return x * jax.lax.rsqrt(jnp.maximum(ssq, norm_floor_sq))

        def nan_to_num(x):
            # torch.nan_to_num(x, nan=0.0, posinf=1.0, neginf=-1.0), literal-only.
            x = jnp.where(jnp.isnan(x), 0.0, x)
            x = jnp.where(x == jnp.inf, 1.0, x)
            x = jnp.where(x == -jnp.inf, -1.0, x)
            return x

        ph = l2_normalize(ph_ref[...])
        pt = l2_normalize(pt_ref[...])
        nh = l2_normalize(nh_ref[...])
        nt = l2_normalize(nt_ref[...])

        pos_diff = ph + pr_ref[...] - pt
        neg_diff = nh + nr_ref[...] - nt
        # Scores broadcast across all lanes (rows constant along the lane axis).
        pos_scores = nan_to_num(jnp.sqrt(row_ssq(pos_diff)))
        neg_scores = nan_to_num(jnp.sqrt(row_ssq(neg_diff)))

        # MarginRankingLoss(neg, pos, target=1, reduction='none')
        #   = max(0, -(neg - pos) + margin) = max(0, pos - neg + margin)
        loss = jnp.maximum(pos_scores - neg_scores + margin_f, 0.0)  # (TB, D), lane-dense

        # Mask padded tail rows.  (The reference's isfinite valid-mask is always
        # True after nan_to_num, so it is not re-computed here.)
        row = (pl.program_id(0) * tile_rows
               + jax.lax.broadcasted_iota(jnp.int32, loss.shape, 0))
        masked = jnp.where(row < batch_size, loss, 0.0)

        # Sublane reduce only: since loss rows are constant across lanes, every lane
        # of this (1, D) row already equals the exact per-tile loss sum.
        tile_sum_row = jnp.sum(masked, axis=0, keepdims=True)           # (1, D)
        if d >= 128:
            lane_block = tile_sum_row[:, :128]                          # (1, 128), exact
        else:
            lane_block = jnp.broadcast_to(
                jnp.sum(tile_sum_row, axis=1, keepdims=True) * (1.0 / d), (1, 128))
        sum_ref[...] = jnp.broadcast_to(lane_block, (8, 128))

    return kernel


def transe_loss_sum(pos_embeds, neg_embeds, margin: float,
                    batch_size: int, tile_rows: int):
    """pos_embeds / neg_embeds: tuples of (head, rel, tail), each (padded_B, D) f32.
    Returns the masked loss sum over the first `batch_size` rows as an f32 scalar."""
    ph, pr, pt = pos_embeds
    nh, nr, nt = neg_embeds
    padded_b, d = ph.shape
    assert padded_b % tile_rows == 0
    num_tiles = padded_b // tile_rows

    in_spec = pl.BlockSpec((tile_rows, d), lambda i: (i, 0))
    out_spec = pl.BlockSpec((8, 128), lambda i: (i, 0))

    sums = pl.pallas_call(
        _make_transe_tile_kernel(float(margin), batch_size, tile_rows, d),
        out_shape=jax.ShapeDtypeStruct((num_tiles * 8, 128), jnp.float32),
        grid=(num_tiles,),
        in_specs=[in_spec] * 6,
        out_specs=out_spec,
        compiler_params=pltpu.CompilerParams(
            dimension_semantics=("parallel",),
            vmem_limit_bytes=48 * 1024 * 1024),
    )(ph, pr, pt, nh, nr, nt)

    # One scalar per tile lives at [tile, 0, 0]; the rest of the (8,128) block is a
    # lane-dense broadcast of the same value (keeps the store unmasked / vst-friendly).
    return jnp.sum(sums.reshape(num_tiles, 8, 128)[:, 0, 0])


class TransEModelPallas:
    """JAX/Pallas re-implementation of TransEModel.forward."""

    # 2048 rows x 128 dims x f32 x 6 inputs x 2 buffers ≈ 12 MiB of pipelined input
    # VMEM — fits v5e/v6e/v7x with the 48 MiB scoped limit set above and amortizes
    # the per-grid-step overhead on fast-HBM parts (v7x).
    DEFAULT_TILE_ROWS = 2048

    def __init__(self, entity_count, relation_count, embedding_dim, margin=1.0,
                 key=jax.random.PRNGKey(0)):
        ke, kr = jax.random.split(key)
        ent = jax.random.uniform(ke, (entity_count, embedding_dim),
                                 minval=-0.05, maxval=0.05, dtype=jnp.float32)
        rel = jax.random.uniform(kr, (relation_count, embedding_dim),
                                 minval=-0.05, maxval=0.05, dtype=jnp.float32)
        # entity embeddings are L2-normalized at init (as in the module)
        ent = ent / jnp.maximum(jnp.linalg.norm(ent, axis=1, keepdims=True), 1e-12)
        self.entity_embeddings = ent
        self.relation_embeddings = rel
        self.margin = float(margin)
        self.embedding_dim = embedding_dim

    def forward(self, positive_triples, negative_triples):
        pos_h, pos_r, pos_t = positive_triples
        neg_h, neg_r, neg_t = negative_triples
        b = int(pos_h.shape[0])
        if b == 0:
            # Matches the reference's `valid_mask.sum() == 0` fallback.
            return jnp.float32(0.1)

        tile_rows = min(self.DEFAULT_TILE_ROWS, _round_up(b, 8))
        padded_b = _round_up(b, tile_rows)
        pad = padded_b - b

        def pad_idx(idx):
            idx = idx.astype(jnp.int32)
            return jnp.pad(idx, (0, pad)) if pad else idx

        pos_h, pos_r, pos_t, neg_h, neg_r, neg_t = map(
            pad_idx, (pos_h, pos_r, pos_t, neg_h, neg_r, neg_t))

        # Embedding lookups (XLA glue).
        # TODO(synk): fuse this gather into the kernel (scalar-prefetched indices +
        # VMEM-resident tables or per-row HBM DMA) to cut HBM traffic ~3x.
        pe = (jnp.take(self.entity_embeddings, pos_h, axis=0),
              jnp.take(self.relation_embeddings, pos_r, axis=0),
              jnp.take(self.entity_embeddings, pos_t, axis=0))
        ne = (jnp.take(self.entity_embeddings, neg_h, axis=0),
              jnp.take(self.relation_embeddings, neg_r, axis=0),
              jnp.take(self.entity_embeddings, neg_t, axis=0))

        loss_sum = transe_loss_sum(pe, ne, self.margin, b, tile_rows)
        # With nan_to_num applied, every loss element is finite, so the reference's
        # valid count is exactly b.
        return loss_sum / jnp.float32(b)


def _reference_loss(model, positive_triples, negative_triples):
    """Pure-jnp reference mirroring the PyTorch forward, for a sanity check."""
    eps = 1e-8

    def norm(x):
        x = x + eps
        return x / jnp.maximum(jnp.linalg.norm(x, axis=1, keepdims=True), 1e-12)

    ph = norm(jnp.take(model.entity_embeddings, positive_triples[0], axis=0))
    pr = jnp.take(model.relation_embeddings, positive_triples[1], axis=0)
    pt = norm(jnp.take(model.entity_embeddings, positive_triples[2], axis=0))
    nh = norm(jnp.take(model.entity_embeddings, negative_triples[0], axis=0))
    nr = jnp.take(model.relation_embeddings, negative_triples[1], axis=0)
    nt = norm(jnp.take(model.entity_embeddings, negative_triples[2], axis=0))
    pos = jnp.linalg.norm(ph + pr - pt, axis=1)
    neg = jnp.linalg.norm(nh + nr - nt, axis=1)
    pos = jnp.nan_to_num(pos, nan=0.0, posinf=1.0, neginf=-1.0)
    neg = jnp.nan_to_num(neg, nan=0.0, posinf=1.0, neginf=-1.0)
    return jnp.mean(jnp.maximum(0.0, pos - neg + model.margin))


if __name__ == "__main__":
    # embedding_dim=128 keeps the lane axis fully utilized; batch=12 (not a
    # multiple of 8) exercises the in-kernel tail-row masking.
    entity_count, relation_count, embedding_dim = 64, 16, 128
    batch = 12
    model = TransEModelPallas(entity_count, relation_count, embedding_dim,
                              margin=1.0, key=jax.random.PRNGKey(0))

    key = jax.random.PRNGKey(0)
    k1, k2, k3, k4 = jax.random.split(key, 4)
    pos_h = jax.random.randint(k1, (batch,), 0, entity_count)
    pos_r = jax.random.randint(k2, (batch,), 0, relation_count)
    pos_t = jax.random.randint(k3, (batch,), 0, entity_count)
    # negatives: corrupt the head entity
    neg_h = jax.random.randint(k4, (batch,), 0, entity_count)
    neg_r = pos_r
    neg_t = pos_t

    loss = model.forward((pos_h, pos_r, pos_t), (neg_h, neg_r, neg_t))
    loss = jax.block_until_ready(loss)

    ref = _reference_loss(model, (pos_h, pos_r, pos_t), (neg_h, neg_r, neg_t))
    # Tolerance covers the worst case where the in-kernel f32 ones-matmul row-sums
    # run at reduced MXU precision on some generations; typically the match is ~1e-6.
    assert jnp.allclose(loss, ref, atol=2e-3, rtol=2e-3), (loss, ref)

    print("KERNEL_OK")
</pallas_src>

<mosaic_0001>
module attributes {stable_mosaic.version = 11 : i64} {
  func.func @kernel(%arg0: i32, %arg1: memref<16x128xf32, #tpu.memory_space<vmem>>, %arg2: memref<16x128xf32, #tpu.memory_space<vmem>>, %arg3: memref<16x128xf32, #tpu.memory_space<vmem>>, %arg4: memref<16x128xf32, #tpu.memory_space<vmem>>, %arg5: memref<16x128xf32, #tpu.memory_space<vmem>>, %arg6: memref<16x128xf32, #tpu.memory_space<vmem>>, %arg7: memref<8x128xf32, #tpu.memory_space<vmem>>) attributes {dimension_semantics = [#tpu.dimension_semantics<parallel>], iteration_bounds = array<i64: 1>, scalar_prefetch = 0 : i64, scratch_operands = 0 : i64, tpu.core_type = #tpu.core_type<tc>, window_params = [{transform_indices = @transform_0, window_bounds = array<i64: 16, 128>}, {transform_indices = @transform_1, window_bounds = array<i64: 16, 128>}, {transform_indices = @transform_2, window_bounds = array<i64: 16, 128>}, {transform_indices = @transform_3, window_bounds = array<i64: 16, 128>}, {transform_indices = @transform_4, window_bounds = array<i64: 16, 128>}, {transform_indices = @transform_5, window_bounds = array<i64: 16, 128>}, {transform_indices = @transform_6, window_bounds = array<i64: 8, 128>}]} {
    %cst = arith.constant 1.000000e+00 : f32
    %0 = vector.broadcast %cst : f32 to vector<128x128xf32>
    %c0 = arith.constant 0 : index
    %c0_0 = arith.constant 0 : index
    %1 = vector.load %arg1[%c0, %c0_0] : memref<16x128xf32, #tpu.memory_space<vmem>>, vector<16x128xf32>
    %cst_1 = arith.constant 9.99999993E-9 : f32
    %2 = vector.broadcast %cst_1 : f32 to vector<16x128xf32>
    %3 = arith.addf %1, %2 : vector<16x128xf32>
    %4 = arith.mulf %3, %3 : vector<16x128xf32>
    %cst_2 = arith.constant dense<0.000000e+00> : vector<16x128xf32>
    %5 = tpu.matmul %4, %0, %cst_2 {dimension_numbers = #tpu.dot_dimension_numbers<[1], [0], [0], [1], [0, 0, 1, 1], [], []>} : vector<16x128xf32>, vector<128x128xf32>, vector<16x128xf32> -> vector<16x128xf32>
    %cst_3 = arith.constant 1.000000e-24 : f32
    %6 = vector.broadcast %cst_3 : f32 to vector<16x128xf32>
    %7 = arith.maximumf %5, %6 : vector<16x128xf32>
    %8 = math.rsqrt %7 : vector<16x128xf32>
    %9 = arith.mulf %3, %8 : vector<16x128xf32>
    %c0_4 = arith.constant 0 : index
    %c0_5 = arith.constant 0 : index
    %10 = vector.load %arg3[%c0_4, %c0_5] : memref<16x128xf32, #tpu.memory_space<vmem>>, vector<16x128xf32>
    %cst_6 = arith.constant 9.99999993E-9 : f32
    %11 = vector.broadcast %cst_6 : f32 to vector<16x128xf32>
    %12 = arith.addf %10, %11 : vector<16x128xf32>
    %13 = arith.mulf %12, %12 : vector<16x128xf32>
    %cst_7 = arith.constant dense<0.000000e+00> : vector<16x128xf32>
    %14 = tpu.matmul %13, %0, %cst_7 {dimension_numbers = #tpu.dot_dimension_numbers<[1], [0], [0], [1], [0, 0, 1, 1], [], []>} : vector<16x128xf32>, vector<128x128xf32>, vector<16x128xf32> -> vector<16x128xf32>
    %cst_8 = arith.constant 1.000000e-24 : f32
    %15 = vector.broadcast %cst_8 : f32 to vector<16x128xf32>
    %16 = arith.maximumf %14, %15 : vector<16x128xf32>
    %17 = math.rsqrt %16 : vector<16x128xf32>
    %18 = arith.mulf %12, %17 : vector<16x128xf32>
    %c0_9 = arith.constant 0 : index
    %c0_10 = arith.constant 0 : index
    %19 = vector.load %arg4[%c0_9, %c0_10] : memref<16x128xf32, #tpu.memory_space<vmem>>, vector<16x128xf32>
    %cst_11 = arith.constant 9.99999993E-9 : f32
    %20 = vector.broadcast %cst_11 : f32 to vector<16x128xf32>
    %21 = arith.addf %19, %20 : vector<16x128xf32>
    %22 = arith.mulf %21, %21 : vector<16x128xf32>
    %cst_12 = arith.constant dense<0.000000e+00> : vector<16x128xf32>
    %23 = tpu.matmul %22, %0, %cst_12 {dimension_numbers = #tpu.dot_dimension_numbers<[1], [0], [0], [1], [0, 0, 1, 1], [], []>} : vector<16x128xf32>, vector<128x128xf32>, vector<16x128xf32> -> vector<16x128xf32>
    %cst_13 = arith.constant 1.000000e-24 : f32
    %24 = vector.broadcast %cst_13 : f32 to vector<16x128xf32>
    %25 = arith.maximumf %23, %24 : vector<16x128xf32>
    %26 = math.rsqrt %25 : vector<16x128xf32>
    %27 = arith.mulf %21, %26 : vector<16x128xf32>
    %c0_14 = arith.constant 0 : index
    %c0_15 = arith.constant 0 : index
    %28 = vector.load %arg6[%c0_14, %c0_15] : memref<16x128xf32, #tpu.memory_space<vmem>>, vector<16x128xf32>
    %cst_16 = arith.constant 9.99999993E-9 : f32
    %29 = vector.broadcast %cst_16 : f32 to vector<16x128xf32>
    %30 = arith.addf %28, %29 : vector<16x128xf32>
    %31 = arith.mulf %30, %30 : vector<16x128xf32>
    %cst_17 = arith.constant dense<0.000000e+00> : vector<16x128xf32>
    %32 = tpu.matmul %31, %0, %cst_17 {dimension_numbers = #tpu.dot_dimension_numbers<[1], [0], [0], [1], [0, 0, 1, 1], [], []>} : vector<16x128xf32>, vector<128x128xf32>, vector<16x128xf32> -> vector<16x128xf32>
    %cst_18 = arith.constant 1.000000e-24 : f32
    %33 = vector.broadcast %cst_18 : f32 to vector<16x128xf32>
    %34 = arith.maximumf %32, %33 : vector<16x128xf32>
    %35 = math.rsqrt %34 : vector<16x128xf32>
    %36 = arith.mulf %30, %35 : vector<16x128xf32>
    %c0_19 = arith.constant 0 : index
    %c0_20 = arith.constant 0 : index
    %37 = vector.load %arg2[%c0_19, %c0_20] : memref<16x128xf32, #tpu.memory_space<vmem>>, vector<16x128xf32>
    %38 = arith.addf %9, %37 : vector<16x128xf32>
    %39 = arith.subf %38, %18 : vector<16x128xf32>
    %c0_21 = arith.constant 0 : index
    %c0_22 = arith.constant 0 : index
    %40 = vector.load %arg5[%c0_21, %c0_22] : memref<16x128xf32, #tpu.memory_space<vmem>>, vector<16x128xf32>
    %41 = arith.addf %27, %40 : vector<16x128xf32>
    %42 = arith.subf %41, %36 : vector<16x128xf32>
    %43 = arith.mulf %39, %39 : vector<16x128xf32>
    %cst_23 = arith.constant dense<0.000000e+00> : vector<16x128xf32>
    %44 = tpu.matmul %43, %0, %cst_23 {dimension_numbers = #tpu.dot_dimension_numbers<[1], [0], [0], [1], [0, 0, 1, 1], [], []>} : vector<16x128xf32>, vector<128x128xf32>, vector<16x128xf32> -> vector<16x128xf32>
    %45 = math.sqrt %44 : vector<16x128xf32>
    %46 = arith.cmpf one, %45, %45 : vector<16x128xf32>
    %cst_24 = arith.constant 0.000000e+00 : f32
    %47 = vector.broadcast %cst_24 : f32 to vector<16x128xf32>
    %48 = arith.select %46, %47, %45 : vector<16x128xi1>, vector<16x128xf32>
    %cst_25 = arith.constant 0x7F800000 : f32
    %49 = vector.broadcast %cst_25 : f32 to vector<16x128xf32>
    %50 = arith.cmpf oeq, %48, %49 : vector<16x128xf32>
    %cst_26 = arith.constant 1.000000e+00 : f32
    %51 = vector.broadcast %cst_26 : f32 to vector<16x128xf32>
    %52 = arith.select %50, %51, %48 : vector<16x128xi1>, vector<16x128xf32>
    %cst_27 = arith.constant 0xFF800000 : f32
    %53 = vector.broadcast %cst_27 : f32 to vector<16x128xf32>
    %54 = arith.cmpf oeq, %52, %53 : vector<16x128xf32>
    %cst_28 = arith.constant -1.000000e+00 : f32
    %55 = vector.broadcast %cst_28 : f32 to vector<16x128xf32>
    %56 = arith.select %54, %55, %52 : vector<16x128xi1>, vector<16x128xf32>
    %57 = arith.mulf %42, %42 : vector<16x128xf32>
    %cst_29 = arith.constant dense<0.000000e+00> : vector<16x128xf32>
    %58 = tpu.matmul %57, %0, %cst_29 {dimension_numbers = #tpu.dot_dimension_numbers<[1], [0], [0], [1], [0, 0, 1, 1], [], []>} : vector<16x128xf32>, vector<128x128xf32>, vector<16x128xf32> -> vector<16x128xf32>
    %59 = math.sqrt %58 : vector<16x128xf32>
    %60 = arith.cmpf one, %59, %59 : vector<16x128xf32>
    %cst_30 = arith.constant 0.000000e+00 : f32
    %61 = vector.broadcast %cst_30 : f32 to vector<16x128xf32>
    %62 = arith.select %60, %61, %59 : vector<16x128xi1>, vector<16x128xf32>
    %cst_31 = arith.constant 0x7F800000 : f32
    %63 = vector.broadcast %cst_31 : f32 to vector<16x128xf32>
    %64 = arith.cmpf oeq, %62, %63 : vector<16x128xf32>
    %cst_32 = arith.constant 1.000000e+00 : f32
    %65 = vector.broadcast %cst_32 : f32 to vector<16x128xf32>
    %66 = arith.select %64, %65, %62 : vector<16x128xi1>, vector<16x128xf32>
    %cst_33 = arith.constant 0xFF800000 : f32
    %67 = vector.broadcast %cst_33 : f32 to vector<16x128xf32>
    %68 = arith.cmpf oeq, %66, %67 : vector<16x128xf32>
    %cst_34 = arith.constant -1.000000e+00 : f32
    %69 = vector.broadcast %cst_34 : f32 to vector<16x128xf32>
    %70 = arith.select %68, %69, %66 : vector<16x128xi1>, vector<16x128xf32>
    %71 = arith.subf %56, %70 : vector<16x128xf32>
    %cst_35 = arith.constant 1.000000e+00 : f32
    %72 = vector.broadcast %cst_35 : f32 to vector<16x128xf32>
    %73 = arith.addf %71, %72 : vector<16x128xf32>
    %cst_36 = arith.constant 0.000000e+00 : f32
    %74 = vector.broadcast %cst_36 : f32 to vector<16x128xf32>
    %75 = arith.maximumf %73, %74 : vector<16x128xf32>
    %c16_i32 = arith.constant 16 : i32
    %76 = arith.muli %arg0, %c16_i32 : i32
    %77 = tpu.iota {dimensions = array<i32: 0>} : vector<16x128xi32>
    %78 = vector.broadcast %76 : i32 to vector<16x128xi32>
    %79 = arith.addi %78, %77 : vector<16x128xi32>
    %c12_i32 = arith.constant 12 : i32
    %80 = vector.broadcast %c12_i32 : i32 to vector<16x128xi32>
    %81 = arith.cmpi slt, %79, %80 : vector<16x128xi32>
    %cst_37 = arith.constant 0.000000e+00 : f32
    %82 = vector.broadcast %cst_37 : f32 to vector<16x128xf32>
    %83 = arith.select %81, %75, %82 : vector<16x128xi1>, vector<16x128xf32>
    %cst_38 = arith.constant dense<0.000000e+00> : vector<128xf32>
    %84 = vector.multi_reduction <add>, %83, %cst_38 [0] : vector<16x128xf32> to vector<128xf32>
    %85 = vector.shape_cast %84 : vector<128xf32> to vector<1x128xf32>
    %86 = vector.shape_cast %85 : vector<1x128xf32> to vector<1x128xf32>
    %87 = vector.broadcast %86 : vector<1x128xf32> to vector<8x128xf32>
    %c0_39 = arith.constant 0 : index
    %c0_40 = arith.constant 0 : index
    %88 = vector.load %arg7[%c0_39, %c0_40] : memref<8x128xf32, #tpu.memory_space<vmem>>, vector<8x128xf32>
    tpu.vector_store %arg7[%c0_39, %c0_40], %87 {strides = array<i32>} : memref<8x128xf32, #tpu.memory_space<vmem>>, vector<8x128xf32>,
    return
  }
  func.func @transform_0(%arg0: i32) -> (i32, i32) {
    %c0_i32 = arith.constant 0 : i32
    %c0_i32_0 = arith.constant 0 : i32
    return %arg0, %c0_i32 : i32, i32
  }
  func.func @transform_1(%arg0: i32) -> (i32, i32) {
    %c0_i32 = arith.constant 0 : i32
    %c0_i32_0 = arith.constant 0 : i32
    return %arg0, %c0_i32 : i32, i32
  }
  func.func @transform_2(%arg0: i32) -> (i32, i32) {
    %c0_i32 = arith.constant 0 : i32
    %c0_i32_0 = arith.constant 0 : i32
    return %arg0, %c0_i32 : i32, i32
  }
  func.func @transform_3(%arg0: i32) -> (i32, i32) {
    %c0_i32 = arith.constant 0 : i32
    %c0_i32_0 = arith.constant 0 : i32
    return %arg0, %c0_i32 : i32, i32
  }
  func.func @transform_4(%arg0: i32) -> (i32, i32) {
    %c0_i32 = arith.constant 0 : i32
    %c0_i32_0 = arith.constant 0 : i32
    return %arg0, %c0_i32 : i32, i32
  }
  func.func @transform_5(%arg0: i32) -> (i32, i32) {
    %c0_i32 = arith.constant 0 : i32
    %c0_i32_0 = arith.constant 0 : i32
    return %arg0, %c0_i32 : i32, i32
  }
  func.func @transform_6(%arg0: i32) -> (i32, i32) {
    %c0_i32 = arith.constant 0 : i32
    %c0_i32_0 = arith.constant 0 : i32
    return %arg0, %c0_i32 : i32, i32
  }
}

</mosaic_0001>

<llo_original>
// kernel: tpu_custom_call.1
$region0: #{tpu_custom_call.1}
  #allocation0 [shape = 'u32[]', space=smem, size = 0x4, offset = 0x4, fixed_abs, tag = 'smem constant byte address 0x4 - core index']
  #allocation1 [shape = 'u32[144,128]{1,0:T(1,128)}', space=vmem, size = 0x12000, scoped, tag = 'internal scratch']
  %s0 = inlined_call_operand.hbm [shape: f32[16,128], index: 0, kind: input, shape index: {}]
  %s1 = inlined_call_operand.hbm [shape: f32[16,128], index: 1, kind: input, shape index: {}]
  %s2 = inlined_call_operand.hbm [shape: f32[16,128], index: 2, kind: input, shape index: {}]
  %s3 = inlined_call_operand.hbm [shape: f32[16,128], index: 3, kind: input, shape index: {}]
  %s4 = inlined_call_operand.hbm [shape: f32[16,128], index: 4, kind: input, shape index: {}]
  %s5 = inlined_call_operand.hbm [shape: f32[16,128], index: 5, kind: input, shape index: {}]
  %s6 = inlined_call_operand.hbm [shape: f32[8,128], index: 6, kind: output, shape index: {}]
  %s7 = sld [smem:[#allocation0]]
  $region58: #{tpu_custom_call.1} parent=0
    _
  %s9 = ssub.s32 1, %s7
  %s10 = scalar_select 0, %s9, %s7
  $region1: #{tpu_custom_call.1} parent=0
    #allocation2 [shape = 'u8[8192]{0}', space=vmem, size = 0x2000, scoped, tag = 'input window, operand 0, single buffered']
    #allocation3 [shape = 's32[1]{0}', space=sflag, size = 0x4, scoped, tag = 'scoped memory for tpu_custom_call.1']
    #allocation4 [shape = 's32[1]{0}', space=sflag, size = 0x4, scoped, tag = 'scoped memory for tpu_custom_call.1']
    #allocation5 [shape = 'u8[8192]{0}', space=vmem, size = 0x2000, scoped, tag = 'input window, operand 1, single buffered']
    #allocation6 [shape = 's32[1]{0}', space=sflag, size = 0x4, scoped, tag = 'scoped memory for tpu_custom_call.1']
    #allocation7 [shape = 'u8[8192]{0}', space=vmem, size = 0x2000, scoped, tag = 'input window, operand 2, single buffered']
    #allocation8 [shape = 'u8[8192]{0}', space=vmem, size = 0x2000, scoped, tag = 'input window, operand 3, single buffered']
    #allocation9 [shape = 's32[1]{0}', space=sflag, size = 0x4, scoped, tag = 'scoped memory for tpu_custom_call.1']
    #allocation10 [shape = 'u8[8192]{0}', space=vmem, size = 0x2000, scoped, tag = 'input window, operand 4, single buffered']
    #allocation11 [shape = 'u8[8192]{0}', space=vmem, size = 0x2000, scoped, tag = 'input window, operand 5, single buffered']
    #allocation12 [shape = 's32[1]{0}', space=sflag, size = 0x4, scoped, tag = 'scoped memory for tpu_custom_call.1']
    #allocation13 [shape = 'u8[4096]{0}', space=vmem, size = 0x1000, scoped, tag = 'output window, operand 0, single buffered']
    %11 = vsyncpa [#allocation3], 0
    %12 = vsyncpa [#allocation6], 0
    %13 = vsyncpa [#allocation9], 0
    %14 = vsyncpa [#allocation12], 0
    %15 = vsyncpa [#allocation4], 0
    // Predicated region
    $region2: #{tpu_custom_call.1} parent=1 // pred_check
      _
    $region3: #{tpu_custom_call.1} parent=1 // pred_check_branch
      %17 = sbr.rel (0) target = $region5
    $region4: #{tpu_custom_call.1} parent=1 // pred_region
      %s19 = ssub.s32 256, 256
      %20 = vsyncadd [#allocation3], %s19
      %s21 = sshll.u32 [#allocation2], 4
      %s22 = int_to_ptr.vmem [resolvable:$true] %s21
      %27 = dma.hbm_to_vmem [thread:$0]  %s0, 256, %s22, [#allocation3], 128, 128, 8
    $region5: #{tpu_custom_call.1} parent=1 // pred_fallthru
      _
    // Predicated region
    $region6: #{tpu_custom_call.1} parent=1 // pred_check
      _
    $region7: #{tpu_custom_call.1} parent=1 // pred_check_branch
      %29 = sbr.rel (0) target = $region9
    $region8: #{tpu_custom_call.1} parent=1 // pred_region
      %s31 = ssub.s32 256, 256
      %32 = vsyncadd [#allocation6], %s31
      %s33 = sshll.u32 [#allocation5], 4
      %s34 = int_to_ptr.vmem [resolvable:$true] %s33
      %39 = dma.hbm_to_vmem [thread:$0]  %s1, 256, %s34, [#allocation6], 128, 128, 8
    $region9: #{tpu_custom_call.1} parent=1 // pred_fallthru
      _
    // Predicated region
    $region10: #{tpu_custom_call.1} parent=1 // pred_check
      _
    $region11: #{tpu_custom_call.1} parent=1 // pred_check_branch
      %41 = sbr.rel (0) target = $region13
    $region12: #{tpu_custom_call.1} parent=1 // pred_region
      %s43 = ssub.s32 256, 256
      %44 = vsyncadd [#allocation6], %s43
      %s45 = sshll.u32 [#allocation7], 4
      %s46 = int_to_ptr.vmem [resolvable:$true] %s45
      %51 = dma.hbm_to_vmem [thread:$0]  %s2, 256, %s46, [#allocation6], 128, 128, 8
    $region13: #{tpu_custom_call.1} parent=1 // pred_fallthru
      _
    // Predicated region
    $region14: #{tpu_custom_call.1} parent=1 // pred_check
      _
    $region15: #{tpu_custom_call.1} parent=1 // pred_check_branch
      %53 = sbr.rel (0) target = $region17
    $region16: #{tpu_custom_call.1} parent=1 // pred_region
      %s55 = ssub.s32 256, 256
      %56 = vsyncadd [#allocation9], %s55
      %s57 = sshll.u32 [#allocation8], 4
      %s58 = int_to_ptr.vmem [resolvable:$true] %s57
      %63 = dma.hbm_to_vmem [thread:$0]  %s3, 256, %s58, [#allocation9], 128, 128, 8
    $region17: #{tpu_custom_call.1} parent=1 // pred_fallthru
      _
    // Predicated region
    $region18: #{tpu_custom_call.1} parent=1 // pred_check
      _
    $region19: #{tpu_custom_call.1} parent=1 // pred_check_branch
      %65 = sbr.rel (0) target = $region21
    $region20: #{tpu_custom_call.1} parent=1 // pred_region
      %s67 = ssub.s32 256, 256
      %68 = vsyncadd [#allocation9], %s67
      %s69 = sshll.u32 [#allocation10], 4
      %s70 = int_to_ptr.vmem [resolvable:$true] %s69
      %75 = dma.hbm_to_vmem [thread:$0]  %s4, 256, %s70, [#allocation9], 128, 128, 8
    $region21: #{tpu_custom_call.1} parent=1 // pred_fallthru
      _
    // Predicated region
    $region22: #{tpu_custom_call.1} parent=1 // pred_check
      _
    $region23: #{tpu_custom_call.1} parent=1 // pred_check_branch
      %77 = sbr.rel (0) target = $region25
    $region24: #{tpu_custom_call.1} parent=1 // pred_region
      %s79 = ssub.s32 256, 256
      %80 = vsyncadd [#allocation12], %s79
      %s81 = sshll.u32 [#allocation11], 4
      %s82 = int_to_ptr.vmem [resolvable:$true] %s81
      %87 = dma.hbm_to_vmem [thread:$0]  %s5, 256, %s82, [#allocation12], 128, 128, 8
    $region25: #{tpu_custom_call.1} parent=1 // pred_fallthru
      _
    // Predicated region
    $region26: #{tpu_custom_call.1} parent=1 // pred_check
      _
    $region27: #{tpu_custom_call.1} parent=1 // pred_check_branch
      %89 = sbr.rel (0) target = $region29
    $region28: #{tpu_custom_call.1} parent=1 // pred_region
      %90 = dma.done [#allocation3], 256
    $region29: #{tpu_custom_call.1} parent=1 // pred_fallthru
      _
    // Predicated region
    $region30: #{tpu_custom_call.1} parent=1 // pred_check
      _
    $region31: #{tpu_custom_call.1} parent=1 // pred_check_branch
      %92 = sbr.rel (0) target = $region33
    $region32: #{tpu_custom_call.1} parent=1 // pred_region
      %93 = dma.done [#allocation6], 256
    $region33: #{tpu_custom_call.1} parent=1 // pred_fallthru
      _
    // Predicated region
    $region34: #{tpu_custom_call.1} parent=1 // pred_check
      _
    $region35: #{tpu_custom_call.1} parent=1 // pred_check_branch
      %95 = sbr.rel (0) target = $region37
    $region36: #{tpu_custom_call.1} parent=1 // pred_region
      %96 = dma.done [#allocation6], 256
    $region37: #{tpu_custom_call.1} parent=1 // pred_fallthru
      _
    // Predicated region
    $region38: #{tpu_custom_call.1} parent=1 // pred_check
      _
    $region39: #{tpu_custom_call.1} parent=1 // pred_check_branch
      %98 = sbr.rel (0) target = $region41
    $region40: #{tpu_custom_call.1} parent=1 // pred_region
      %99 = dma.done [#allocation9], 256
    $region41: #{tpu_custom_call.1} parent=1 // pred_fallthru
      _
    // Predicated region
    $region42: #{tpu_custom_call.1} parent=1 // pred_check
      _
    $region43: #{tpu_custom_call.1} parent=1 // pred_check_branch
      %101 = sbr.rel (0) target = $region45
    $region44: #{tpu_custom_call.1} parent=1 // pred_region
      %102 = dma.done [#allocation9], 256
    $region45: #{tpu_custom_call.1} parent=1 // pred_fallthru
      _
    // Predicated region
    $region46: #{tpu_custom_call.1} parent=1 // pred_check
      _
    $region47: #{tpu_custom_call.1} parent=1 // pred_check_branch
      %104 = sbr.rel (0) target = $region49
    $region48: #{tpu_custom_call.1} parent=1 // pred_region
      %105 = dma.done [#allocation12], 256
    $region49: #{tpu_custom_call.1} parent=1 // pred_fallthru
      _
    %v106 = vld [vmem:[#allocation2] sm:$0xff]
    %v107 = vld [vmem:[#allocation2 + $0x8] sm:$0xff]
    %v108 = vadd.f32 %v106, 1e-08
    %v109 = vadd.f32 %v107, 1e-08
    %v110 = vmul.f32 %v108, %v108
    %v111 = vmul.f32 %v109, %v109
    %112 = vmatprep.subr.mxu0 0.0
    %113 = vmatpush1.msra.mxu0 1.0
    %114 = vmatprep.subr.mxu0 0.0
    %115 = vmatpush1.msra.mxu0 1.0
    %116 = vmatprep.subr.mxu0 0.0
    %117 = vmatpush1.msra.mxu0 1.0
    %118 = vmatprep.subr.mxu0 0.0
    %119 = vmatpush1.msra.mxu0 1.0
    %120 = vmatprep.subr.mxu0 0.0
    %121 = vmatpush1.msra.mxu0 1.0
    %122 = vmatprep.subr.mxu0 0.0
    %123 = vmatpush1.msra.mxu0 1.0
    %124 = vmatprep.subr.mxu0 0.0
    %125 = vmatpush1.msra.mxu0 1.0
    %126 = vmatprep.subr.mxu0 0.0
    %127 = vmatpush1.msra.mxu0 1.0
    %128 = vmatprep.subr.mxu0 0.0
    %129 = vmatpush1.msra.mxu0 1.0
    %130 = vmatprep.subr.mxu0 0.0
    %131 = vmatpush1.msra.mxu0 1.0
    %132 = vmatprep.subr.mxu0 0.0
    %133 = vmatpush1.msra.mxu0 1.0
    %134 = vmatprep.subr.mxu0 0.0
    %135 = vmatpush1.msra.mxu0 1.0
    %136 = vmatprep.subr.mxu0 0.0
    %137 = vmatpush1.msra.mxu0 1.0
    %138 = vmatprep.subr.mxu0 0.0
    %139 = vmatpush1.msra.mxu0 1.0
    %140 = vmatprep.subr.mxu0 0.0
    %141 = vmatpush1.msra.mxu0 1.0
    %142 = vmatprep.subr.mxu0 0.0
    %143 = vmatpush1.msra.mxu0 1.0
    %144 = vmatprep.subr.mxu0 0.0
    %145 = vmatpush2.msra.mxu0 0.0
    %146 = vmatprep.subr.mxu0 0.0
    %147 = vmatpush2.msra.mxu0 0.0
    %148 = vmatprep.subr.mxu0 0.0
    %149 = vmatpush2.msra.mxu0 0.0
    %150 = vmatprep.subr.mxu0 0.0
    %151 = vmatpush2.msra.mxu0 0.0
    %152 = vmatprep.subr.mxu0 0.0
    %153 = vmatpush2.msra.mxu0 0.0
    %154 = vmatprep.subr.mxu0 0.0
    %155 = vmatpush2.msra.mxu0 0.0
    %156 = vmatprep.subr.mxu0 0.0
    %157 = vmatpush2.msra.mxu0 0.0
    %158 = vmatprep.subr.mxu0 0.0
    %159 = vmatpush2.msra.mxu0 0.0
    %160 = vmatprep.subr.mxu0 0.0
    %161 = vmatpush2.msra.mxu0 0.0
    %162 = vmatprep.subr.mxu0 0.0
    %163 = vmatpush2.msra.mxu0 0.0
    %164 = vmatprep.subr.mxu0 0.0
    %165 = vmatpush2.msra.mxu0 0.0
    %166 = vmatprep.subr.mxu0 0.0
    %167 = vmatpush2.msra.mxu0 0.0
    %168 = vmatprep.subr.mxu0 0.0
    %169 = vmatpush2.msra.mxu0 0.0
    %170 = vmatprep.subr.mxu0 0.0
    %171 = vmatpush2.msra.mxu0 0.0
    %172 = vmatprep.subr.mxu0 0.0
    %173 = vmatpush2.msra.mxu0 0.0
    %174 = vmatprep.subr.mxu0 0.0
    %175 = vmatpush2.msra.mxu0 0.0
    %176 = vmatprep.mubr.f32.mxu0 0.0
    %177 = vmatmul.mubr.f32.gmra.mxu0 %v110
    %v178 = vpop.f32.mrf.mxu0
    %v179 = vadd.f32 0.0, %v178
    %v180 = vpop.f32.mrf.mxu0
    %181 = vmatprep.mubr.f32.mxu0 0.0
    %182 = vmatmul.mubr.f32.gmra.mxu0 %v111
    %v183 = vpop.f32.mrf.mxu0
    %v184 = vadd.f32 0.0, %v183
    %v185 = vpop.f32.mrf.mxu0
    %186 = vdwg.mxu0
    %v187 = vmax.f32 %v179, 1e-24
    %v188 = vmax.f32 %v184, 1e-24
    %v189 = vrsqrt.pop %v187
    %v190 = vrsqrt.pop %v188
    %v191 = vmul.f32 %v108, %v189
    %v192 = vmul.f32 %v109, %v190
    %v193 = vld [vmem:[#allocation7] sm:$0xff]
    %v194 = vld [vmem:[#allocation7 + $0x8] sm:$0xff]
    %v195 = vadd.f32 %v193, 1e-08
    %v196 = vadd.f32 %v194, 1e-08
    %v197 = vmul.f32 %v195, %v195
    %v198 = vmul.f32 %v196, %v196
    %199 = vmatprep.subr.mxu0 0.0
    %200 = vmatpush1.msra.mxu0 1.0
    %201 = vmatprep.subr.mxu0 0.0
    %202 = vmatpush1.msra.mxu0 1.0
    %203 = vmatprep.subr.mxu0 0.0
    %204 = vmatpush1.msra.mxu0 1.0
    %205 = vmatprep.subr.mxu0 0.0
    %206 = vmatpush1.msra.mxu0 1.0
    %207 = vmatprep.subr.mxu0 0.0
    %208 = vmatpush1.msra.mxu0 1.0
    %209 = vmatprep.subr.mxu0 0.0
    %210 = vmatpush1.msra.mxu0 1.0
    %211 = vmatprep.subr.mxu0 0.0
    %212 = vmatpush1.msra.mxu0 1.0
    %213 = vmatprep.subr.mxu0 0.0
    %214 = vmatpush1.msra.mxu0 1.0
    %215 = vmatprep.subr.mxu0 0.0
    %216 = vmatpush1.msra.mxu0 1.0
    %217 = vmatprep.subr.mxu0 0.0
    %218 = vmatpush1.msra.mxu0 1.0
    %219 = vmatprep.subr.mxu0 0.0
    %220 = vmatpush1.msra.mxu0 1.0
    %221 = vmatprep.subr.mxu0 0.0
    %222 = vmatpush1.msra.mxu0 1.0
    %223 = vmatprep.subr.mxu0 0.0
    %224 = vmatpush1.msra.mxu0 1.0
    %225 = vmatprep.subr.mxu0 0.0
    %226 = vmatpush1.msra.mxu0 1.0
    %227 = vmatprep.subr.mxu0 0.0
    %228 = vmatpush1.msra.mxu0 1.0
    %229 = vmatprep.subr.mxu0 0.0
    %230 = vmatpush1.msra.mxu0 1.0
    %231 = vmatprep.subr.mxu0 0.0
    %232 = vmatpush2.msra.mxu0 0.0
    %233 = vmatprep.subr.mxu0 0.0
    %234 = vmatpush2.msra.mxu0 0.0
    %235 = vmatprep.subr.mxu0 0.0
    %236 = vmatpush2.msra.mxu0 0.0
    %237 = vmatprep.subr.mxu0 0.0
    %238 = vmatpush2.msra.mxu0 0.0
    %239 = vmatprep.subr.mxu0 0.0
    %240 = vmatpush2.msra.mxu0 0.0
    %241 = vmatprep.subr.mxu0 0.0
    %242 = vmatpush2.msra.mxu0 0.0
    %243 = vmatprep.subr.mxu0 0.0
    %244 = vmatpush2.msra.mxu0 0.0
    %245 = vmatprep.subr.mxu0 0.0
    %246 = vmatpush2.msra.mxu0 0.0
    %247 = vmatprep.subr.mxu0 0.0
    %248 = vmatpush2.msra.mxu0 0.0
    %249 = vmatprep.subr.mxu0 0.0
    %250 = vmatpush2.msra.mxu0 0.0
    %251 = vmatprep.subr.mxu0 0.0
    %252 = vmatpush2.msra.mxu0 0.0
    %253 = vmatprep.subr.mxu0 0.0
    %254 = vmatpush2.msra.mxu0 0.0
    %255 = vmatprep.subr.mxu0 0.0
    %256 = vmatpush2.msra.mxu0 0.0
    %257 = vmatprep.subr.mxu0 0.0
    %258 = vmatpush2.msra.mxu0 0.0
    %259 = vmatprep.subr.mxu0 0.0
    %260 = vmatpush2.msra.mxu0 0.0
    %261 = vmatprep.subr.mxu0 0.0
    %262 = vmatpush2.msra.mxu0 0.0
    %263 = vmatprep.mubr.f32.mxu0 0.0
    %264 = vmatmul.mubr.f32.gmra.mxu0 %v197
    %v265 = vpop.f32.mrf.mxu0
    %v266 = vadd.f32 0.0, %v265
    %v267 = vpop.f32.mrf.mxu0
    %268 = vmatprep.mubr.f32.mxu0 0.0
    %269 = vmatmul.mubr.f32.gmra.mxu0 %v198
    %v270 = vpop.f32.mrf.mxu0
    %v271 = vadd.f32 0.0, %v270
    %v272 = vpop.f32.mrf.mxu0
    %273 = vdwg.mxu0
    %v274 = vmax.f32 %v266, 1e-24
    %v275 = vmax.f32 %v271, 1e-24
    %v276 = vrsqrt.pop %v274
    %v277 = vrsqrt.pop %v275
    %v278 = vmul.f32 %v195, %v276
    %v279 = vmul.f32 %v196, %v277
    %v280 = vld [vmem:[#allocation8] sm:$0xff]
    %v281 = vld [vmem:[#allocation8 + $0x8] sm:$0xff]
    %v282 = vadd.f32 %v280, 1e-08
    %v283 = vadd.f32 %v281, 1e-08
    %v284 = vmul.f32 %v282, %v282
    %v285 = vmul.f32 %v283, %v283
    %286 = vmatprep.subr.mxu0 0.0
    %287 = vmatpush1.msra.mxu0 1.0
    %288 = vmatprep.subr.mxu0 0.0
    %289 = vmatpush1.msra.mxu0 1.0
    %290 = vmatprep.subr.mxu0 0.0
    %291 = vmatpush1.msra.mxu0 1.0
    %292 = vmatprep.subr.mxu0 0.0
    %293 = vmatpush1.msra.mxu0 1.0
    %294 = vmatprep.subr.mxu0 0.0
    %295 = vmatpush1.msra.mxu0 1.0
    %296 = vmatprep.subr.mxu0 0.0
    %297 = vmatpush1.msra.mxu0 1.0
    %298 = vmatprep.subr.mxu0 0.0
    %299 = vmatpush1.msra.mxu0 1.0
    %300 = vmatprep.subr.mxu0 0.0
    %301 = vmatpush1.msra.mxu0 1.0
    %302 = vmatprep.subr.mxu0 0.0
    %303 = vmatpush1.msra.mxu0 1.0
    %304 = vmatprep.subr.mxu0 0.0
    %305 = vmatpush1.msra.mxu0 1.0
    %306 = vmatprep.subr.mxu0 0.0
    %307 = vmatpush1.msra.mxu0 1.0
    %308 = vmatprep.subr.mxu0 0.0
    %309 = vmatpush1.msra.mxu0 1.0
    %310 = vmatprep.subr.mxu0 0.0
    %311 = vmatpush1.msra.mxu0 1.0
    %312 = vmatprep.subr.mxu0 0.0
    %313 = vmatpush1.msra.mxu0 1.0
    %314 = vmatprep.subr.mxu0 0.0
    %315 = vmatpush1.msra.mxu0 1.0
    %316 = vmatprep.subr.mxu0 0.0
    %317 = vmatpush1.msra.mxu0 1.0
    %318 = vmatprep.subr.mxu0 0.0
    %319 = vmatpush2.msra.mxu0 0.0
    %320 = vmatprep.subr.mxu0 0.0
    %321 = vmatpush2.msra.mxu0 0.0
    %322 = vmatprep.subr.mxu0 0.0
    %323 = vmatpush2.msra.mxu0 0.0
    %324 = vmatprep.subr.mxu0 0.0
    %325 = vmatpush2.msra.mxu0 0.0
    %326 = vmatprep.subr.mxu0 0.0
    %327 = vmatpush2.msra.mxu0 0.0
    %328 = vmatprep.subr.mxu0 0.0
    %329 = vmatpush2.msra.mxu0 0.0
    %330 = vmatprep.subr.mxu0 0.0
    %331 = vmatpush2.msra.mxu0 0.0
    %332 = vmatprep.subr.mxu0 0.0
    %333 = vmatpush2.msra.mxu0 0.0
    %334 = vmatprep.subr.mxu0 0.0
    %335 = vmatpush2.msra.mxu0 0.0
    %336 = vmatprep.subr.mxu0 0.0
    %337 = vmatpush2.msra.mxu0 0.0
    %338 = vmatprep.subr.mxu0 0.0
    %339 = vmatpush2.msra.mxu0 0.0
    %340 = vmatprep.subr.mxu0 0.0
    %341 = vmatpush2.msra.mxu0 0.0
    %342 = vmatprep.subr.mxu0 0.0
    %343 = vmatpush2.msra.mxu0 0.0
    %344 = vmatprep.subr.mxu0 0.0
    %345 = vmatpush2.msra.mxu0 0.0
    %346 = vmatprep.subr.mxu0 0.0
    %347 = vmatpush2.msra.mxu0 0.0
    %348 = vmatprep.subr.mxu0 0.0
    %349 = vmatpush2.msra.mxu0 0.0
    %350 = vmatprep.mubr.f32.mxu0 0.0
    %351 = vmatmul.mubr.f32.gmra.mxu0 %v284
    %v352 = vpop.f32.mrf.mxu0
    %v353 = vadd.f32 0.0, %v352
    %v354 = vpop.f32.mrf.mxu0
    %355 = vmatprep.mubr.f32.mxu0 0.0
    %356 = vmatmul.mubr.f32.gmra.mxu0 %v285
    %v357 = vpop.f32.mrf.mxu0
    %v358 = vadd.f32 0.0, %v357
    %v359 = vpop.f32.mrf.mxu0
    %360 = vdwg.mxu0
    %v361 = vmax.f32 %v353, 1e-24
    %v362 = vmax.f32 %v358, 1e-24
    %v363 = vrsqrt.pop %v361
    %v364 = vrsqrt.pop %v362
    %v365 = vmul.f32 %v282, %v363
    %v366 = vmul.f32 %v283, %v364
    %v367 = vld [vmem:[#allocation11] sm:$0xff]
    %v368 = vld [vmem:[#allocation11 + $0x8] sm:$0xff]
    %v369 = vadd.f32 %v367, 1e-08
    %v370 = vadd.f32 %v368, 1e-08
    %v371 = vmul.f32 %v369, %v369
    %v372 = vmul.f32 %v370, %v370
    %373 = vmatprep.subr.mxu0 0.0
    %374 = vmatpush1.msra.mxu0 1.0
    %375 = vmatprep.subr.mxu0 0.0
    %376 = vmatpush1.msra.mxu0 1.0
    %377 = vmatprep.subr.mxu0 0.0
    %378 = vmatpush1.msra.mxu0 1.0
    %379 = vmatprep.subr.mxu0 0.0
    %380 = vmatpush1.msra.mxu0 1.0
    %381 = vmatprep.subr.mxu0 0.0
    %382 = vmatpush1.msra.mxu0 1.0
    %383 = vmatprep.subr.mxu0 0.0
    %384 = vmatpush1.msra.mxu0 1.0
    %385 = vmatprep.subr.mxu0 0.0
    %386 = vmatpush1.msra.mxu0 1.0
    %387 = vmatprep.subr.mxu0 0.0
    %388 = vmatpush1.msra.mxu0 1.0
    %389 = vmatprep.subr.mxu0 0.0
    %390 = vmatpush1.msra.mxu0 1.0
    %391 = vmatprep.subr.mxu0 0.0
    %392 = vmatpush1.msra.mxu0 1.0
    %393 = vmatprep.subr.mxu0 0.0
    %394 = vmatpush1.msra.mxu0 1.0
    %395 = vmatprep.subr.mxu0 0.0
    %396 = vmatpush1.msra.mxu0 1.0
    %397 = vmatprep.subr.mxu0 0.0
    %398 = vmatpush1.msra.mxu0 1.0
    %399 = vmatprep.subr.mxu0 0.0
    %400 = vmatpush1.msra.mxu0 1.0
    %401 = vmatprep.subr.mxu0 0.0
    %402 = vmatpush1.msra.mxu0 1.0
    %403 = vmatprep.subr.mxu0 0.0
    %404 = vmatpush1.msra.mxu0 1.0
    %405 = vmatprep.subr.mxu0 0.0
    %406 = vmatpush2.msra.mxu0 0.0
    %407 = vmatprep.subr.mxu0 0.0
    %408 = vmatpush2.msra.mxu0 0.0
    %409 = vmatprep.subr.mxu0 0.0
    %410 = vmatpush2.msra.mxu0 0.0
    %411 = vmatprep.subr.mxu0 0.0
    %412 = vmatpush2.msra.mxu0 0.0
    %413 = vmatprep.subr.mxu0 0.0
    %414 = vmatpush2.msra.mxu0 0.0
    %415 = vmatprep.subr.mxu0 0.0
    %416 = vmatpush2.msra.mxu0 0.0
    %417 = vmatprep.subr.mxu0 0.0
    %418 = vmatpush2.msra.mxu0 0.0
    %419 = vmatprep.subr.mxu0 0.0
    %420 = vmatpush2.msra.mxu0 0.0
    %421 = vmatprep.subr.mxu0 0.0
    %422 = vmatpush2.msra.mxu0 0.0
    %423 = vmatprep.subr.mxu0 0.0
    %424 = vmatpush2.msra.mxu0 0.0
    %425 = vmatprep.subr.mxu0 0.0
    %426 = vmatpush2.msra.mxu0 0.0
    %427 = vmatprep.subr.mxu0 0.0
    %428 = vmatpush2.msra.mxu0 0.0
    %429 = vmatprep.subr.mxu0 0.0
    %430 = vmatpush2.msra.mxu0 0.0
    %431 = vmatprep.subr.mxu0 0.0
    %432 = vmatpush2.msra.mxu0 0.0
    %433 = vmatprep.subr.mxu0 0.0
    %434 = vmatpush2.msra.mxu0 0.0
    %435 = vmatprep.subr.mxu0 0.0
    %436 = vmatpush2.msra.mxu0 0.0
    %437 = vmatprep.mubr.f32.mxu0 0.0
    %438 = vmatmul.mubr.f32.gmra.mxu0 %v371
    %v439 = vpop.f32.mrf.mxu0
    %v440 = vadd.f32 0.0, %v439
    %v441 = vpop.f32.mrf.mxu0
    %442 = vmatprep.mubr.f32.mxu0 0.0
    %443 = vmatmul.mubr.f32.gmra.mxu0 %v372
    %v444 = vpop.f32.mrf.mxu0
    %v445 = vadd.f32 0.0, %v444
    %v446 = vpop.f32.mrf.mxu0
    %447 = vdwg.mxu0
    %v448 = vmax.f32 %v440, 1e-24
    %v449 = vmax.f32 %v445, 1e-24
    %v450 = vrsqrt.pop %v448
    %v451 = vrsqrt.pop %v449
    %v452 = vmul.f32 %v369, %v450
    %v453 = vmul.f32 %v370, %v451
    %v454 = vld [vmem:[#allocation5] sm:$0xff]
    %v455 = vld [vmem:[#allocation5 + $0x8] sm:$0xff]
    %v456 = vadd.f32 %v191, %v454
    %v457 = vadd.f32 %v192, %v455
    %v458 = vsub.f32 %v456, %v278
    %v459 = vsub.f32 %v457, %v279
    %v460 = vld [vmem:[#allocation10] sm:$0xff]
    %v461 = vld [vmem:[#allocation10 + $0x8] sm:$0xff]
    %v462 = vadd.f32 %v365, %v460
    %v463 = vadd.f32 %v366, %v461
    %v464 = vsub.f32 %v462, %v452
    %v465 = vsub.f32 %v463, %v453
    %v466 = vmul.f32 %v458, %v458
    %v467 = vmul.f32 %v459, %v459
    %468 = vmatprep.subr.mxu0 0.0
    %469 = vmatpush1.msra.mxu0 1.0
    %470 = vmatprep.subr.mxu0 0.0
    %471 = vmatpush1.msra.mxu0 1.0
    %472 = vmatprep.subr.mxu0 0.0
    %473 = vmatpush1.msra.mxu0 1.0
    %474 = vmatprep.subr.mxu0 0.0
    %475 = vmatpush1.msra.mxu0 1.0
    %476 = vmatprep.subr.mxu0 0.0
    %477 = vmatpush1.msra.mxu0 1.0
    %478 = vmatprep.subr.mxu0 0.0
    %479 = vmatpush1.msra.mxu0 1.0
    %480 = vmatprep.subr.mxu0 0.0
    %481 = vmatpush1.msra.mxu0 1.0
    %482 = vmatprep.subr.mxu0 0.0
    %483 = vmatpush1.msra.mxu0 1.0
    %484 = vmatprep.subr.mxu0 0.0
    %485 = vmatpush1.msra.mxu0 1.0
    %486 = vmatprep.subr.mxu0 0.0
    %487 = vmatpush1.msra.mxu0 1.0
    %488 = vmatprep.subr.mxu0 0.0
    %489 = vmatpush1.msra.mxu0 1.0
    %490 = vmatprep.subr.mxu0 0.0
    %491 = vmatpush1.msra.mxu0 1.0
    %492 = vmatprep.subr.mxu0 0.0
    %493 = vmatpush1.msra.mxu0 1.0
    %494 = vmatprep.subr.mxu0 0.0
    %495 = vmatpush1.msra.mxu0 1.0
    %496 = vmatprep.subr.mxu0 0.0
    %497 = vmatpush1.msra.mxu0 1.0
    %498 = vmatprep.subr.mxu0 0.0
    %499 = vmatpush1.msra.mxu0 1.0
    %500 = vmatprep.subr.mxu0 0.0
    %501 = vmatpush2.msra.mxu0 0.0
    %502 = vmatprep.subr.mxu0 0.0
    %503 = vmatpush2.msra.mxu0 0.0
    %504 = vmatprep.subr.mxu0 0.0
    %505 = vmatpush2.msra.mxu0 0.0
    %506 = vmatprep.subr.mxu0 0.0
    %507 = vmatpush2.msra.mxu0 0.0
    %508 = vmatprep.subr.mxu0 0.0
    %509 = vmatpush2.msra.mxu0 0.0
    %510 = vmatprep.subr.mxu0 0.0
    %511 = vmatpush2.msra.mxu0 0.0
    %512 = vmatprep.subr.mxu0 0.0
    %513 = vmatpush2.msra.mxu0 0.0
    %514 = vmatprep.subr.mxu0 0.0
    %515 = vmatpush2.msra.mxu0 0.0
    %516 = vmatprep.subr.mxu0 0.0
    %517 = vmatpush2.msra.mxu0 0.0
    %518 = vmatprep.subr.mxu0 0.0
    %519 = vmatpush2.msra.mxu0 0.0
    %520 = vmatprep.subr.mxu0 0.0
    %521 = vmatpush2.msra.mxu0 0.0
    %522 = vmatprep.subr.mxu0 0.0
    %523 = vmatpush2.msra.mxu0 0.0
    %524 = vmatprep.subr.mxu0 0.0
    %525 = vmatpush2.msra.mxu0 0.0
    %526 = vmatprep.subr.mxu0 0.0
    %527 = vmatpush2.msra.mxu0 0.0
    %528 = vmatprep.subr.mxu0 0.0
    %529 = vmatpush2.msra.mxu0 0.0
    %530 = vmatprep.subr.mxu0 0.0
    %531 = vmatpush2.msra.mxu0 0.0
    %532 = vmatprep.mubr.f32.mxu0 0.0
    %533 = vmatmul.mubr.f32.gmra.mxu0 %v466
    %v534 = vpop.f32.mrf.mxu0
    %v535 = vadd.f32 0.0, %v534
    %v536 = vpop.f32.mrf.mxu0
    %537 = vmatprep.mubr.f32.mxu0 0.0
    %538 = vmatmul.mubr.f32.gmra.mxu0 %v467
    %v539 = vpop.f32.mrf.mxu0
    %v540 = vadd.f32 0.0, %v539
    %v541 = vpop.f32.mrf.mxu0
    %542 = vdwg.mxu0
    %v543 = vrsqrt.pop %v535
    %v544 = vmul.f32 %v535, %v543
    %vm545 = vcmp.eq.f32.partialorder %v535, inf
    %v546 = vsel %vm545, %v535, %v544
    %vm547 = vcmp.eq.f32.partialorder %v535, 0.0
    %v548 = vand.u32 %v535, 2147483648
    %v549 = vsel %vm547, %v548, %v546
    %v550 = vrsqrt.pop %v540
    %v551 = vmul.f32 %v540, %v550
    %vm552 = vcmp.eq.f32.partialorder %v540, inf
    %v553 = vsel %vm552, %v540, %v551
    %vm554 = vcmp.eq.f32.partialorder %v540, 0.0
    %v555 = vand.u32 %v540, 2147483648
    %v556 = vsel %vm554, %v555, %v553
    %vm557 = vcmp.ne.f32.partialorder %v549, %v549
    %vm558 = vcmp.ne.f32.partialorder %v556, %v556
    %v559 = vsel %vm557, 0.0, %v549
    %v560 = vsel %vm558, 0.0, %v556
    %vm561 = vcmp.eq.f32.partialorder %v559, inf
    %vm562 = vcmp.eq.f32.partialorder %v560, inf
    %v563 = vsel %vm561, 1.0, %v559
    %v564 = vsel %vm562, 1.0, %v560
    %vm565 = vcmp.eq.f32.partialorder %v563, -inf
    %vm566 = vcmp.eq.f32.partialorder %v564, -inf
    %v567 = vsel %vm565, -1.0, %v563
    %v568 = vsel %vm566, -1.0, %v564
    %v569 = vmul.f32 %v464, %v464
    %v570 = vmul.f32 %v465, %v465
    %571 = vmatprep.subr.mxu0 0.0
    %572 = vmatpush1.msra.mxu0 1.0
    %573 = vmatprep.subr.mxu0 0.0
    %574 = vmatpush1.msra.mxu0 1.0
    %575 = vmatprep.subr.mxu0 0.0
    %576 = vmatpush1.msra.mxu0 1.0
    %577 = vmatprep.subr.mxu0 0.0
    %578 = vmatpush1.msra.mxu0 1.0
    %579 = vmatprep.subr.mxu0 0.0
    %580 = vmatpush1.msra.mxu0 1.0
    %581 = vmatprep.subr.mxu0 0.0
    %582 = vmatpush1.msra.mxu0 1.0
    %583 = vmatprep.subr.mxu0 0.0
    %584 = vmatpush1.msra.mxu0 1.0
    %585 = vmatprep.subr.mxu0 0.0
    %586 = vmatpush1.msra.mxu0 1.0
    %587 = vmatprep.subr.mxu0 0.0
    %588 = vmatpush1.msra.mxu0 1.0
    %589 = vmatprep.subr.mxu0 0.0
    %590 = vmatpush1.msra.mxu0 1.0
    %591 = vmatprep.subr.mxu0 0.0
    %592 = vmatpush1.msra.mxu0 1.0
    %593 = vmatprep.subr.mxu0 0.0
    %594 = vmatpush1.msra.mxu0 1.0
    %595 = vmatprep.subr.mxu0 0.0
    %596 = vmatpush1.msra.mxu0 1.0
    %597 = vmatprep.subr.mxu0 0.0
    %598 = vmatpush1.msra.mxu0 1.0
    %599 = vmatprep.subr.mxu0 0.0
    %600 = vmatpush1.msra.mxu0 1.0
    %601 = vmatprep.subr.mxu0 0.0
    %602 = vmatpush1.msra.mxu0 1.0
    %603 = vmatprep.subr.mxu0 0.0
    %604 = vmatpush2.msra.mxu0 0.0
    %605 = vmatprep.subr.mxu0 0.0
    %606 = vmatpush2.msra.mxu0 0.0
    %607 = vmatprep.subr.mxu0 0.0
    %608 = vmatpush2.msra.mxu0 0.0
    %609 = vmatprep.subr.mxu0 0.0
    %610 = vmatpush2.msra.mxu0 0.0
    %611 = vmatprep.subr.mxu0 0.0
    %612 = vmatpush2.msra.mxu0 0.0
    %613 = vmatprep.subr.mxu0 0.0
    %614 = vmatpush2.msra.mxu0 0.0
    %615 = vmatprep.subr.mxu0 0.0
    %616 = vmatpush2.msra.mxu0 0.0
    %617 = vmatprep.subr.mxu0 0.0
    %618 = vmatpush2.msra.mxu0 0.0
    %619 = vmatprep.subr.mxu0 0.0
    %620 = vmatpush2.msra.mxu0 0.0
    %621 = vmatprep.subr.mxu0 0.0
    %622 = vmatpush2.msra.mxu0 0.0
    %623 = vmatprep.subr.mxu0 0.0
    %624 = vmatpush2.msra.mxu0 0.0
    %625 = vmatprep.subr.mxu0 0.0
    %626 = vmatpush2.msra.mxu0 0.0
    %627 = vmatprep.subr.mxu0 0.0
    %628 = vmatpush2.msra.mxu0 0.0
    %629 = vmatprep.subr.mxu0 0.0
    %630 = vmatpush2.msra.mxu0 0.0
    %631 = vmatprep.subr.mxu0 0.0
    %632 = vmatpush2.msra.mxu0 0.0
    %633 = vmatprep.subr.mxu0 0.0
    %634 = vmatpush2.msra.mxu0 0.0
    %635 = vmatprep.mubr.f32.mxu0 0.0
    %636 = vmatmul.mubr.f32.gmra.mxu0 %v569
    %v637 = vpop.f32.mrf.mxu0
    %v638 = vadd.f32 0.0, %v637
    %v639 = vpop.f32.mrf.mxu0
    %640 = vmatprep.mubr.f32.mxu0 0.0
    %641 = vmatmul.mubr.f32.gmra.mxu0 %v570
    %v642 = vpop.f32.mrf.mxu0
    %v643 = vadd.f32 0.0, %v642
    %v644 = vpop.f32.mrf.mxu0
    %645 = vdwg.mxu0
    %v646 = vrsqrt.pop %v638
    %v647 = vmul.f32 %v638, %v646
    %vm648 = vcmp.eq.f32.partialorder %v638, inf
    %v649 = vsel %vm648, %v638, %v647
    %vm650 = vcmp.eq.f32.partialorder %v638, 0.0
    %v651 = vand.u32 %v638, 2147483648
    %v652 = vsel %vm650, %v651, %v649
    %v653 = vrsqrt.pop %v643
    %v654 = vmul.f32 %v643, %v653
    %vm655 = vcmp.eq.f32.partialorder %v643, inf
    %v656 = vsel %vm655, %v643, %v654
    %vm657 = vcmp.eq.f32.partialorder %v643, 0.0
    %v658 = vand.u32 %v643, 2147483648
    %v659 = vsel %vm657, %v658, %v656
    %vm660 = vcmp.ne.f32.partialorder %v652, %v652
    %vm661 = vcmp.ne.f32.partialorder %v659, %v659
    %v662 = vsel %vm660, 0.0, %v652
    %v663 = vsel %vm661, 0.0, %v659
    %vm664 = vcmp.eq.f32.partialorder %v662, inf
    %vm665 = vcmp.eq.f32.partialorder %v663, inf
    %v666 = vsel %vm664, 1.0, %v662
    %v667 = vsel %vm665, 1.0, %v663
    %vm668 = vcmp.eq.f32.partialorder %v666, -inf
    %vm669 = vcmp.eq.f32.partialorder %v667, -inf
    %v670 = vsel %vm668, -1.0, %v666
    %v671 = vsel %vm669, -1.0, %v667
    %v672 = vsub.f32 %v567, %v670
    %v673 = vsub.f32 %v568, %v671
    %v674 = vadd.f32 %v672, 1.0
    %v675 = vadd.f32 %v673, 1.0
    %v676 = vmax.f32 %v674, 0.0
    %v677 = vmax.f32 %v675, 0.0
    %s678 = smul.u32 0, 16
    %v679 = vlaneseq
    %v680 = vshrl.u32 %v679, 7
    %v681 = vadd.s32 %v680, 8
    %v682 = vstv %s678
    %v683 = vadd.s32 %v682, %v680
    %v684 = vadd.s32 %v682, %v681
    %vm685 = vcmp.lt.s32.totalorder %v683, 12
    %vm686 = vcmp.lt.s32.totalorder %v684, 12
    %v687 = vsel %vm685, %v676, 0.0
    %v688 = vsel %vm686, %v677, 0.0
    %v689 = vadd.f32 %v687, %v688
    %v690 = vrot.slane %v689, 4
    %v691 = vadd.f32 %v689, %v690
    %v692 = vrot.slane %v691, 2
    %v693 = vadd.f32 %v691, %v692
    %v694 = vrot.slane %v693, 1
    %v695 = vadd.f32 %v693, %v694
    %696 = vst [vmem:[#allocation13] sm:$0xff] %v695
    // Predicated region
    $region50: #{tpu_custom_call.1} parent=1 // pred_check
      _
    $region51: #{tpu_custom_call.1} parent=1 // pred_check_branch
      %698 = sbr.rel (0) target = $region53
    $region52: #{tpu_custom_call.1} parent=1 // pred_region
      %s700 = ssub.s32 128, 128
      %701 = vsyncadd [#allocation4], %s700
      %s703 = sshll.u32 [#allocation13], 4
      %s704 = int_to_ptr.vmem [resolvable:$true] %s703
      %706 = dma.vmem_to_hbm [thread:$0]  %s704, 128, %s6, [#allocation4]
    $region53: #{tpu_custom_call.1} parent=1 // pred_fallthru
      _
    // Predicated region
    $region54: #{tpu_custom_call.1} parent=1 // pred_check
      _
    $region55: #{tpu_custom_call.1} parent=1 // pred_check_branch
      %708 = sbr.rel (0) target = $region57
    $region56: #{tpu_custom_call.1} parent=1 // pred_region
      %709 = dma.done [#allocation4], 128
    $region57: #{tpu_custom_call.1} parent=1 // pred_fallthru
      _
    %710 = vsyncpa [#allocation3], 1
    %711 = vsyncpa [#allocation6], 1
    %712 = vsyncpa [#allocation9], 1
    %713 = vsyncpa [#allocation12], 1
    %714 = vsyncpa [#allocation4], 1

</llo_original>
